<compile_context>
chip_gen: v5e
topology: v5e:2x2
jax: 0.10.0
libtpu: 0.0.40
codegen_flags: <defaults>
</compile_context>

<pallas_src>
import functools
import math

import jax
import jax.numpy as jnp
from jax.experimental import pallas as pl
from jax.experimental.pallas import tpu as pltpu

_SQRT2 = math.sqrt(2.0)
_SMALL_FALLBACK_BYTES = 512 * 1024  # below this, pure jnp (fusable) beats a kernel launch


# ----------------------------------------------------------------------------
# Kernel body
# ----------------------------------------------------------------------------
def _scaled_leaky_relu_kernel(x_ref, o_ref, *, negative_slope):
    x = x_ref[...]
    pos = jnp.asarray(_SQRT2, dtype=x.dtype)
    neg = jnp.asarray(negative_slope * _SQRT2, dtype=x.dtype)
    # leaky_relu(x) * sqrt(2) == x * (sqrt(2) if x >= 0 else slope * sqrt(2))
    o_ref[...] = (x * jnp.where(x >= 0, pos, neg)).astype(o_ref.dtype)


# ----------------------------------------------------------------------------
# Helpers
# ----------------------------------------------------------------------------
def _jnp_scaled_leaky_relu(x, negative_slope):
    # Pure-jnp form (used for tiny / awkward sizes): 1 read + 1 write, fusable.
    return jnp.where(x >= 0, x, x * negative_slope) * jnp.asarray(_SQRT2, x.dtype)


def _round_up(a, b):
    return -(-a // b) * b


def _cdiv(a, b):
    return -(-a // b)


def _choose_lanes(n, sublane):
    """Widest lane count dividing n exactly with at least `sublane` rows (zero-copy)."""
    for lanes in (2048, 1024, 512, 256, 128):
        if n % lanes == 0 and (n // lanes) >= sublane:
            return lanes
    return None


def _tpu_block_and_vmem_limit():
    """Generation-aware (block_bytes, vmem_limit_bytes) from the TPU's VMEM size."""
    vmem_cap = 64 << 20  # conservative default: v7x per-TensorCore VMEM
    try:
        vmem_cap = int(pltpu.get_tpu_info().vmem_capacity_bytes)
    except Exception:  # pragma: no cover - interpret mode / older runtimes
        pass
    # ~8 MiB blocks on v6e/v7x/v5e; in+out double-buffered => 4x block live.
    block_bytes = max(1 << 20, min(8 << 20, vmem_cap // 8))
    vmem_limit = min((vmem_cap * 3) // 4, block_bytes * 4 + (16 << 20))
    return block_bytes, vmem_limit


# ----------------------------------------------------------------------------
# Public entry point
# ----------------------------------------------------------------------------
def _scaled_leaky_relu_impl(x, negative_slope=0.2, min_pallas_bytes=_SMALL_FALLBACK_BYTES):
    """Elementwise ScaledLeakyReLU. Floating-point inputs, any shape."""
    if not jnp.issubdtype(x.dtype, jnp.floating):
        raise TypeError(f"scaled_leaky_relu expects a floating dtype, got {x.dtype}")

    orig_shape = x.shape
    dtype = x.dtype
    n = x.size
    itemsize = jnp.dtype(dtype).itemsize
    sublane = max(8, 32 // itemsize)  # 8 for f32, 16 for bf16, 32 for 1-byte dtypes

    # Tiny tensors: kernel dispatch + layout plumbing dominates and defeats
    # XLA fusion with the surrounding conv; the jnp form is strictly faster.
    if n * itemsize < min_pallas_bytes:
        return _jnp_scaled_leaky_relu(x, negative_slope)

    lanes = _choose_lanes(n, sublane)
    # Awkward sizes (no lane width divides n): pad+kernel+slice would ~3x the
    # HBM traffic of this bandwidth-bound op, so use the fusable jnp form.
    if lanes is None:
        return _jnp_scaled_leaky_relu(x, negative_slope)

    rows = n // lanes
    x2d = x.reshape(rows, lanes)  # zero-copy lane-dense view

    block_bytes, vmem_limit = _tpu_block_and_vmem_limit()

    # Row tile: ~block_bytes per step, aligned to native sublane packing.
    tm = block_bytes // (lanes * itemsize)
    tm = max(sublane, (tm // sublane) * sublane)
    # Keep at least 2 grid steps when possible so ("parallel",) actually
    # shards the row axis across both TensorCores on v7x / megacore.
    if rows >= 2 * sublane:
        tm = min(tm, _round_up(_cdiv(rows, 2), sublane))
    tm = min(tm, _round_up(rows, sublane))
    grid = (_cdiv(rows, tm),)  # ragged last row-block handled by Pallas masking

    kernel = functools.partial(_scaled_leaky_relu_kernel, negative_slope=negative_slope)

    out2d = pl.pallas_call(
        kernel,
        out_shape=jax.ShapeDtypeStruct((rows, lanes), dtype),
        grid_spec=pltpu.PrefetchScalarGridSpec(
            num_scalar_prefetch=0,
            grid=grid,
            in_specs=[pl.BlockSpec((tm, lanes), lambda i: (i, 0))],
            out_specs=pl.BlockSpec((tm, lanes), lambda i: (i, 0)),
        ),
        compiler_params=pltpu.CompilerParams(
            dimension_semantics=("parallel",),
            vmem_limit_bytes=vmem_limit,
        ),
    )(x2d)

    return out2d.reshape(orig_shape)


# Jitted wrapper: reshapes alias, dispatch overhead removed; the scalar knobs
# are static so they fold into the kernel at trace time.
scaled_leaky_relu = jax.jit(
    _scaled_leaky_relu_impl, static_argnames=("negative_slope", "min_pallas_bytes")
)


def scaled_leaky_relu_ref(x, negative_slope=0.2):
    # Matches the PyTorch module's rounding order: leaky_relu(x) then * sqrt(2).
    return jnp.where(x >= 0, x, x * negative_slope) * jnp.asarray(_SQRT2, x.dtype)


# ----------------------------------------------------------------------------
# Demo / checks
# ----------------------------------------------------------------------------
if __name__ == "__main__":
    key = jax.random.PRNGKey(0)

    # Spec-sized NCHW f32 case (batch=2, channels=4, spatial=16). Force the
    # Pallas path (min_pallas_bytes=0) so the kernel itself is exercised.
    x = jax.random.normal(key, (2, 4, 16, 16), dtype=jnp.float32)
    out = jax.block_until_ready(
        scaled_leaky_relu(x, negative_slope=0.2, min_pallas_bytes=0)
    )
    ref = scaled_leaky_relu_ref(x, negative_slope=0.2)
    assert out.shape == x.shape and out.dtype == x.dtype
    assert jnp.allclose(out, ref, atol=1e-6, rtol=1e-6), "f32 (small) mismatch"

    # Larger f32 feature map: default path -> Pallas kernel, generation-sized
    # blocks, >= 2 grid steps (both TensorCores on v7x).
    xl = jax.random.normal(jax.random.PRNGKey(1), (2, 16, 128, 128), dtype=jnp.float32)
    outl = jax.block_until_ready(scaled_leaky_relu(xl, negative_slope=0.2))
    refl = scaled_leaky_relu_ref(xl, negative_slope=0.2)
    assert jnp.allclose(outl, refl, atol=1e-6, rtol=1e-6), "f32 (large) mismatch"

    # bf16 activations (native sublane packing = 16 rows).
    xb = jax.random.normal(jax.random.PRNGKey(2), (2, 16, 128, 128), dtype=jnp.bfloat16)
    outb = jax.block_until_ready(scaled_leaky_relu(xb, negative_slope=0.2))
    refb = scaled_leaky_relu_ref(xb, negative_slope=0.2)
    assert outb.shape == xb.shape and outb.dtype == xb.dtype
    assert jnp.allclose(
        outb.astype(jnp.float32), refb.astype(jnp.float32), atol=2e-2, rtol=2e-2
    ), "bf16 mismatch"

    # Tiny awkward size -> tiny-tensor jnp fallback (no pad/slice copies).
    xo = jax.random.normal(jax.random.PRNGKey(3), (3, 5, 7, 11), dtype=jnp.float32)
    outo = jax.block_until_ready(scaled_leaky_relu(xo, negative_slope=0.2))
    refo = scaled_leaky_relu_ref(xo, negative_slope=0.2)
    assert jnp.allclose(outo, refo, atol=1e-6, rtol=1e-6), "tiny-fallback mismatch"

    # Larger awkward size (not divisible by 128) -> fusable jnp fallback.
    xa = jax.random.normal(jax.random.PRNGKey(4), (3, 5, 129, 129), dtype=jnp.float32)
    outa = jax.block_until_ready(scaled_leaky_relu(xa, negative_slope=0.2))
    refa = scaled_leaky_relu_ref(xa, negative_slope=0.2)
    assert jnp.allclose(outa, refa, atol=1e-6, rtol=1e-6), "awkward-fallback mismatch"

    print("KERNEL_OK")
</pallas_src>

<mosaic_0001>
module attributes {stable_mosaic.version = 11 : i64} {
  func.func @_scaled_leaky_relu_kernel(%arg0: i32, %arg1: memref<8x256xf32, #tpu.memory_space<vmem>>, %arg2: memref<8x256xf32, #tpu.memory_space<vmem>>) attributes {dimension_semantics = [#tpu.dimension_semantics<parallel>], iteration_bounds = array<i64: 1>, scalar_prefetch = 0 : i64, scratch_operands = 0 : i64, tpu.core_type = #tpu.core_type<tc>, window_params = [{transform_indices = @transform_0, window_bounds = array<i64: 8, 256>}, {transform_indices = @transform_1, window_bounds = array<i64: 8, 256>}]} {
    %c0 = arith.constant 0 : index
    %c0_0 = arith.constant 0 : index
    %0 = vector.load %arg1[%c0, %c0_0] : memref<8x256xf32, #tpu.memory_space<vmem>>, vector<8x256xf32>
    %cst = arith.constant 0.000000e+00 : f32
    %1 = vector.broadcast %cst : f32 to vector<8x256xf32>
    %2 = arith.cmpf oge, %0, %1 : vector<8x256xf32>
    %cst_1 = arith.constant 1.41421354 : f32
    %cst_2 = arith.constant 0.282842726 : f32
    %3 = vector.broadcast %cst_1 : f32 to vector<8x256xf32>
    %4 = vector.broadcast %cst_2 : f32 to vector<8x256xf32>
    %5 = arith.select %2, %3, %4 : vector<8x256xi1>, vector<8x256xf32>
    %6 = arith.mulf %0, %5 : vector<8x256xf32>
    %c0_3 = arith.constant 0 : index
    %c0_4 = arith.constant 0 : index
    %7 = vector.load %arg2[%c0_3, %c0_4] : memref<8x256xf32, #tpu.memory_space<vmem>>, vector<8x256xf32>
    tpu.vector_store %arg2[%c0_3, %c0_4], %6 {strides = array<i32>} : memref<8x256xf32, #tpu.memory_space<vmem>>, vector<8x256xf32>,
    return
  }
  func.func @transform_0(%arg0: i32) -> (i32, i32) {
    %c0_i32 = arith.constant 0 : i32
    %c0_i32_0 = arith.constant 0 : i32
    return %arg0, %c0_i32 : i32, i32
  }
  func.func @transform_1(%arg0: i32) -> (i32, i32) {
    %c0_i32 = arith.constant 0 : i32
    %c0_i32_0 = arith.constant 0 : i32
    return %arg0, %c0_i32 : i32, i32
  }
}

</mosaic_0001>

<llo_original>
// kernel: _scaled_leaky_relu_impl.1
$region0: #{_scaled_leaky_relu_impl.1}
  #allocation0 [shape = 'u32[]', space=smem, size = 0x4, offset = 0x4, fixed_abs, tag = 'smem constant byte address 0x4 - core index']
  #allocation1 [shape = 'u32[72,128]{1,0:T(1,128)}', space=vmem, size = 0x9000, scoped, tag = 'internal scratch']
  %s0 = inlined_call_operand.vmem [shape: f32[8,256], index: 0, kind: input, shape index: {}]
  %s1 = inlined_call_operand.vmem [shape: f32[8,256], index: 1, kind: output, shape index: {}]
  %s2 = sld [smem:[#allocation0]]
  $region14: #{_scaled_leaky_relu_impl.1} parent=0
    _
  %s4 = ssub.s32 1, %s2
  %s5 = scalar_select 0, %s4, %s2
  // Predicated region
  $region2: #{_scaled_leaky_relu_impl.1} parent=0 // pred_check
    _
  $region3: #{_scaled_leaky_relu_impl.1} parent=0 // pred_check_branch
    %7 = sbr.rel (0) target = $region5
  $region4: #{_scaled_leaky_relu_impl.1} parent=0 // pred_region
    _
  $region5: #{_scaled_leaky_relu_impl.1} parent=0 // pred_fallthru
    _
  %v8 = vld [vmem:[%s0] sm:$0xff]
  %v9 = vld [vmem:[%s0 + $0x8] sm:$0xff]
  %vm10 = vcmp.ge.f32.partialorder %v8, 0.0
  %vm11 = vcmp.ge.f32.partialorder %v9, 0.0
  %v12 = vsel %vm10, 1.4142135, 0.28284273
  %v13 = vsel %vm11, 1.4142135, 0.28284273
  %v14 = vmul.f32 %v8, %v12
  %v15 = vmul.f32 %v9, %v13
  %16 = vst [vmem:[%s1] sm:$0xff] %v14
  %17 = vst [vmem:[%s1 + $0x8] sm:$0xff] %v15
  // Predicated region
  $region6: #{_scaled_leaky_relu_impl.1} parent=0 // pred_check
    _
  $region7: #{_scaled_leaky_relu_impl.1} parent=0 // pred_check_branch
    %19 = sbr.rel (0) target = $region9
  $region8: #{_scaled_leaky_relu_impl.1} parent=0 // pred_region
    _
  $region9: #{_scaled_leaky_relu_impl.1} parent=0 // pred_fallthru
    _
  // Predicated region
  $region10: #{_scaled_leaky_relu_impl.1} parent=0 // pred_check
    _
  $region11: #{_scaled_leaky_relu_impl.1} parent=0 // pred_check_branch
    %21 = sbr.rel (0) target = $region13
  $region12: #{_scaled_leaky_relu_impl.1} parent=0 // pred_region
    _
  $region13: #{_scaled_leaky_relu_impl.1} parent=0 // pred_fallthru
    _

</llo_original>
